<compile_context>
chip_gen: v6e
topology: v6e:2x2x1
jax: 0.10.0
libtpu: 0.0.40
codegen_flags: <defaults>
</compile_context>

<pallas_src>
import jax
import jax.numpy as jnp
from jax.experimental import pallas as pl
from jax.experimental.pallas import tpu as pltpu


# ----------------------------- Pallas kernel ------------------------------- #

def affine_kernel(x_ref, w_ref, b_ref, out_ref):
    # One MXU matmul per row tile; single broadcast bias add on the VPU.
    y = jnp.dot(x_ref[...], w_ref[...], preferred_element_type=jnp.float32)
    out_ref[...] = (y + b_ref[...]).astype(out_ref.dtype)


# --------------------------- wrapper utilities ------------------------------ #

def _compose_affine(params):
    """Fold the whole (linear-only) layer stack into out = pts@A + feats@B + c."""
    wp, bp, wc, bc, wl, bl, wlast, blast = params
    L = wc.shape[0]
    A = wp                                                  # (3, H)
    B = jnp.zeros((wc.shape[1], wp.shape[1]), wp.dtype)     # (in_dim, H)
    c = bp.reshape(-1)                                      # (H,)
    for l in range(L):
        B = B + wc[l]
        c = c + bc[l].reshape(-1)
        if l < L - 1:
            m, d = wl[l], bl[l].reshape(-1)
        else:
            m, d = wlast, blast.reshape(-1)
        A = A @ m
        B = B @ m
        c = c @ m + d
    return A, B, c                                          # (3,out) (in,out) (out,)


def _round_up(x, m):
    return ((x + m - 1) // m) * m


def param_decoder(points, point_feats, params, *, target_packed_rows=1024,
                  vmem_block_bytes=4 << 20, compute_dtype=None):
    """points (N,3) f32, point_feats (N,in_dim) f32 -> (N,out_dim) f32.

    compute_dtype: optionally cast the streamed input / weight to bf16 on
    v6e/v7x to halve HBM traffic (accumulation stays f32 on the MXU).
    """
    N = points.shape[0]

    # --- pre-compose the whole layer stack (wrapper-side, tiny matmuls) ---
    A, B, c = _compose_affine(params)
    W = jnp.concatenate([A, B], axis=0)                 # (3+in_dim, out_dim)
    k_in, out_dim = W.shape

    X = jnp.concatenate([points, point_feats], axis=1)  # (N, 3+in_dim)

    # --- lane-dense packing factor for the narrow output ---
    r = 128 // out_dim if (128 % out_dim == 0) else 1
    k_cols = r * k_in
    n_cols = r * out_dim

    # --- block size: biggest tile under the VMEM budget, prefer grid >= 2 ---
    itemsize = 4 if compute_dtype is None else jnp.dtype(compute_dtype).itemsize
    row_bytes = k_cols * itemsize + n_cols * 4
    blk_cap = max(8, (vmem_block_bytes // row_bytes) // 8 * 8)

    m_raw = -(-N // r)                                   # packed rows (unpadded)
    blk = min(target_packed_rows, blk_cap, _round_up(m_raw, 8))
    if _round_up(m_raw, blk) // blk < 2 and m_raw > 8:
        blk = max(8, _round_up(-(-m_raw // 2), 8))       # keep both v7x cores busy
    m_rows = _round_up(m_raw, blk)
    grid = (m_rows // blk,)
    n_pad = m_rows * r

    if n_pad != N:
        X = jnp.pad(X, ((0, n_pad - N), (0, 0)))         # zero rows, sliced off below

    if r > 1:
        Xp = X.reshape(m_rows, k_cols)                    # free (row-major)
        Wp = jnp.kron(jnp.eye(r, dtype=W.dtype), W)       # (r*k_in, 128) block-diag
        bias = jnp.tile(c, r).reshape(1, n_cols)          # (1, 128)
    else:
        Xp, Wp, bias = X, W, c.reshape(1, out_dim)

    if compute_dtype is not None:
        Xp = Xp.astype(compute_dtype)
        Wp = Wp.astype(compute_dtype)

    out = pl.pallas_call(
        affine_kernel,
        out_shape=jax.ShapeDtypeStruct((m_rows, n_cols), jnp.float32),
        grid=grid,
        in_specs=[
            pl.BlockSpec((blk, k_cols), lambda i: (i, 0)),     # streamed rows
            pl.BlockSpec((k_cols, n_cols), lambda i: (0, 0)),  # resident weight
            pl.BlockSpec((1, n_cols), lambda i: (0, 0)),       # resident bias
        ],
        out_specs=pl.BlockSpec((blk, n_cols), lambda i: (i, 0)),
        compiler_params=pltpu.CompilerParams(
            dimension_semantics=("parallel",)),
    )(Xp, Wp, bias)

    return out.reshape(n_pad, out_dim)[:N]


# ------------------------- synthetic params + ref --------------------------- #

def init_params(key, in_dim, out_dim, hidden_size, n_blocks):
    """Deterministic synthetic weights, shaped like ParamDecoder.__init__.

    Weights stored as (fan_in, fan_out) = transpose of the torch Linear weight.
    """
    dims = [hidden_size] + [hidden_size] * n_blocks + [out_dim]
    num_layers = len(dims)           # n_blocks + 2
    L = num_layers - 1               # number of lin / fc_c layers

    keys = jax.random.split(key, 2 * L + 2)
    kidx = 0

    def lin_init(k, fan_in, fan_out):
        kw, kb = jax.random.split(k)
        scale = 1.0 / jnp.sqrt(fan_in)
        w = jax.random.uniform(kw, (fan_in, fan_out), jnp.float32, -scale, scale)
        b = jax.random.uniform(kb, (fan_out,), jnp.float32, -scale, scale)
        return w, b

    # fc_p : Linear(3, hidden)
    wp, bp = lin_init(keys[kidx], 3, hidden_size); kidx += 1
    bp = bp.reshape(1, hidden_size)

    # fc_c[l] : Linear(in_dim, hidden), l = 0..L-1  (stacked)
    wc_list, bc_list = [], []
    for _ in range(L):
        w, b = lin_init(keys[kidx], in_dim, hidden_size); kidx += 1
        wc_list.append(w); bc_list.append(b.reshape(1, hidden_size))
    wc = jnp.stack(wc_list)            # (L, in_dim, H)
    bc = jnp.stack(bc_list)            # (L, 1, H)

    # lin_l : Linear(dims[l], dims[l+1]); first L-1 are (H,H), last is (H,out_dim)
    wl_list, bl_list = [], []
    for l in range(L - 1):
        w, b = lin_init(keys[kidx], dims[l], dims[l + 1]); kidx += 1
        wl_list.append(w); bl_list.append(b.reshape(1, hidden_size))
    if L - 1 > 0:
        wl = jnp.stack(wl_list)        # (L-1, H, H)
        bl = jnp.stack(bl_list)        # (L-1, 1, H)
    else:                              # guard: no intermediate lin layers
        wl = jnp.zeros((0, hidden_size, hidden_size), jnp.float32)
        bl = jnp.zeros((0, 1, hidden_size), jnp.float32)

    wlast, blast = lin_init(keys[kidx], dims[-2], dims[-1]); kidx += 1
    blast = blast.reshape(1, out_dim)  # (1, out_dim)

    return wp, bp, wc, bc, wl, bl, wlast, blast


def param_decoder_ref(points, point_feats, params):
    """Pure-JAX layer-by-layer reference mirroring the PyTorch forward."""
    wp, bp, wc, bc, wl, bl, wlast, blast = params
    L = wc.shape[0]
    x = points @ wp + bp
    for l in range(L):
        x = x + (point_feats @ wc[l] + bc[l])
        if l < L - 1:
            x = x @ wl[l] + bl[l]
        else:
            x = x @ wlast + blast
    return x


if __name__ == "__main__":
    # Small shapes consistent with the module's forward.
    IN_DIM = 16        # point_feats feature dim
    OUT_DIM = 8        # decoder output dim
    HIDDEN = 32        # hidden_size
    N_BLOCKS = 2       # -> num_layers - 1 = 3 linear stages

    key = jax.random.PRNGKey(0)
    kw = jax.random.fold_in(key, 2)
    params = init_params(kw, IN_DIM, OUT_DIM, HIDDEN, N_BLOCKS)

    for N in (256, 250):   # aligned case + row-padding case
        kp = jax.random.fold_in(key, 10 + N)
        kf = jax.random.fold_in(key, 20 + N)
        points = jax.random.normal(kp, (N, 3), jnp.float32)
        point_feats = jax.random.normal(kf, (N, IN_DIM), jnp.float32)

        out = param_decoder(points, point_feats, params)
        out = jax.block_until_ready(out)

        ref = param_decoder_ref(points, point_feats, params)
        assert out.shape == (N, OUT_DIM)
        # Pre-composition reassociates f32 sums; tolerance stays tight.
        assert jnp.allclose(out, ref, atol=1e-3, rtol=1e-3), \
            f"mismatch vs reference (N={N})"

    print("KERNEL_OK")
</pallas_src>

<mosaic_0001>
module attributes {stable_mosaic.version = 11 : i64} {
  func.func @affine_kernel(%arg0: i32, %arg1: memref<8x304xf32, #tpu.memory_space<vmem>>, %arg2: memref<304x128xf32, #tpu.memory_space<vmem>>, %arg3: memref<1x128xf32, #tpu.memory_space<vmem>>, %arg4: memref<8x128xf32, #tpu.memory_space<vmem>>) attributes {dimension_semantics = [#tpu.dimension_semantics<parallel>], iteration_bounds = array<i64: 2>, scalar_prefetch = 0 : i64, scratch_operands = 0 : i64, tpu.core_type = #tpu.core_type<tc>, window_params = [{transform_indices = @transform_0, window_bounds = array<i64: 8, 304>}, {pipeline_mode = #tpu.pipeline_mode<synchronous>, transform_indices = @transform_1, window_bounds = array<i64: 304, 128>}, {pipeline_mode = #tpu.pipeline_mode<synchronous>, transform_indices = @transform_2, window_bounds = array<i64: 1, 128>}, {transform_indices = @transform_3, window_bounds = array<i64: 8, 128>}]} {
    %c0 = arith.constant 0 : index
    %c0_0 = arith.constant 0 : index
    %0 = vector.load %arg1[%c0, %c0_0] : memref<8x304xf32, #tpu.memory_space<vmem>>, vector<8x304xf32>
    %c0_1 = arith.constant 0 : index
    %c0_2 = arith.constant 0 : index
    %1 = vector.load %arg2[%c0_1, %c0_2] : memref<304x128xf32, #tpu.memory_space<vmem>>, vector<304x128xf32>
    %cst = arith.constant dense<0.000000e+00> : vector<8x128xf32>
    %2 = tpu.matmul %0, %1, %cst {dimension_numbers = #tpu.dot_dimension_numbers<[1], [0], [0], [1], [0, 0, 1, 1], [], []>} : vector<8x304xf32>, vector<304x128xf32>, vector<8x128xf32> -> vector<8x128xf32>
    %c0_3 = arith.constant 0 : index
    %c0_4 = arith.constant 0 : index
    %3 = vector.load %arg3[%c0_3, %c0_4] : memref<1x128xf32, #tpu.memory_space<vmem>>, vector<1x128xf32>
    %4 = vector.broadcast %3 : vector<1x128xf32> to vector<8x128xf32>
    %5 = arith.addf %2, %4 : vector<8x128xf32>
    %c0_5 = arith.constant 0 : index
    %c0_6 = arith.constant 0 : index
    %6 = vector.load %arg4[%c0_5, %c0_6] : memref<8x128xf32, #tpu.memory_space<vmem>>, vector<8x128xf32>
    tpu.vector_store %arg4[%c0_5, %c0_6], %5 {strides = array<i32>} : memref<8x128xf32, #tpu.memory_space<vmem>>, vector<8x128xf32>,
    return
  }
  func.func @transform_0(%arg0: i32) -> (i32, i32) {
    %c0_i32 = arith.constant 0 : i32
    %c0_i32_0 = arith.constant 0 : i32
    return %arg0, %c0_i32 : i32, i32
  }
  func.func @transform_1(%arg0: i32) -> (i32, i32) {
    %c0_i32 = arith.constant 0 : i32
    %c0_i32_0 = arith.constant 0 : i32
    %c0_i32_1 = arith.constant 0 : i32
    return %c0_i32, %c0_i32_0 : i32, i32
  }
  func.func @transform_2(%arg0: i32) -> (i32, i32) {
    %c0_i32 = arith.constant 0 : i32
    %c0_i32_0 = arith.constant 0 : i32
    %c0_i32_1 = arith.constant 0 : i32
    return %c0_i32, %c0_i32_0 : i32, i32
  }
  func.func @transform_3(%arg0: i32) -> (i32, i32) {
    %c0_i32 = arith.constant 0 : i32
    %c0_i32_0 = arith.constant 0 : i32
    return %arg0, %c0_i32 : i32, i32
  }
}

</mosaic_0001>

<llo_original>
// kernel: tpu_custom_call.1
$region0: #{tpu_custom_call.1}
  #allocation0 [shape = 'u32[]', space=smem, size = 0x4, offset = 0x4, fixed_abs, tag = 'smem constant byte address 0x4 - core index']
  #allocation1 [shape = 'u32[144,128]{1,0:T(1,128)}', space=vmem, size = 0x12000, scoped, tag = 'internal scratch']
  %s0 = inlined_call_operand.hbm [shape: f32[16,304], index: 0, kind: input, shape index: {}]
  %s1 = inlined_call_operand.hbm [shape: f32[304,128], index: 1, kind: input, shape index: {}]
  %s2 = inlined_call_operand.vmem [shape: f32[1,128], index: 2, kind: input, shape index: {}]
  %s3 = inlined_call_operand.hbm [shape: f32[16,128], index: 3, kind: output, shape index: {}]
  %s4 = sld [smem:[#allocation0]]
  $region53: #{tpu_custom_call.1} parent=0
    _
  %s6 = ssub.s32 1, %s4
  %s7 = scalar_select 0, %s6, %s4
  $region1: #{tpu_custom_call.1} parent=0
    #allocation2 [shape = 'u8[24576]{0}', space=vmem, size = 0x6000, scoped, tag = 'input window, operand 0']
    #allocation3 [shape = 's32[2]{0}', space=sflag, size = 0x8, scoped, tag = 'scoped memory for tpu_custom_call.1']
    #allocation4 [shape = 's32[2]{0}', space=sflag, size = 0x8, scoped, tag = 'scoped memory for tpu_custom_call.1']
    #allocation5 [shape = 'u8[155648]{0}', space=vmem, size = 0x26000, scoped, tag = 'input window, operand 1, single buffered']
    #allocation6 [shape = 's32[1]{0}', space=sflag, size = 0x4, scoped, tag = 'scoped memory for tpu_custom_call.1']
    #allocation7 [shape = 'u8[8192]{0}', space=vmem, size = 0x2000, scoped, tag = 'output window, operand 0']
    %8 = vsyncpa [#allocation3], 0
    %s9 = scalar_lea.sflag [#allocation3], 1
    %10 = vsyncpa %s9, 0
    %11 = vsyncpa [#allocation6], 0
    %12 = vsyncpa [#allocation4], 0
    %s13 = scalar_lea.sflag [#allocation4], 1
    %14 = vsyncpa %s13, 0
    loop: start=0, step=1, limit=4
    $region2: #{tpu_custom_call.1} parent=1 // loop_pre_header
      _
    $region3: #{tpu_custom_call.1} parent=1 // loop_header
      %s16 = sphi 0, %s20
      %p17 = scmp.ge.s32.totalorder %s16, 4
      %s26 = sphi 0, %s28
      %s29 = sphi 0, %s26
      %s30 = sphi 0, %s29
      %s46 = sphi 0, %s30
      %s50 = sphi 0, %s50
      %s52 = sphi 0, %s50
      %s53 = sphi 0, %s52
      %s67 = sphi 0, %s53
      %s71 = sphi 0, %s71
      %s73 = sphi 0, %s71
      %s74 = sphi 0, %s73
      %s88 = sphi 0, %s74
      %s94 = sphi 0, %s96
      %s97 = sphi 0, %s94
      %s98 = sphi 0, %s97
      %s114 = sphi 0, %s98
    $region4: #{tpu_custom_call.1} parent=1 // loop_header_branch
      %19 = sbr.rel (%p17) target = $region8
    $region5: #{tpu_custom_call.1} parent=1 // loop_body
      %s21 = ssub.s32 %s16, 1
      %s22 = ssub.s32 %s16, 2
      %s23 = sadd.s32 %s16, 1
      %s24 = ssub.s32 %s16, %s23
      %p25 = scmp.eq.s32.totalorder %s24, 0
      %s27 = sadd.s32 %s26, 1
      %s28 = scalar_select %p25, %s26, %s27
      %p31 = pneg %p25
      %p32 = scmp.eq.s32.totalorder %s16, 1
      %p33 = por %p31, %p32
      %p34 = scmp.ne.s32.totalorder %s26, %s29
      %p35 = scmp.eq.s32.totalorder %s16, 0
      %p36 = por %p34, %p35
      %p37 = scmp.ne.s32.totalorder %s26, %s29
      %p38 = scmp.eq.s32.totalorder %s21, 1
      %p39 = por %p37, %p38
      %p40 = scmp.ne.s32.totalorder %s29, %s30
      %p41 = scmp.eq.s32.totalorder %s21, 0
      %p42 = por %p40, %p41
      %p43 = scmp.ne.s32.totalorder %s29, %s30
      %p44 = scmp.eq.s32.totalorder %s22, 1
      %p45 = por %p43, %p44
      %p47 = scmp.ne.s32.totalorder %s30, %s46
      %p48 = scmp.eq.s32.totalorder %s22, 0
      %p49 = por %p47, %p48
      %s51 = sadd.s32 %s50, 1
      %p54 = scmp.eq.s32.totalorder %s16, 1
      %p55 = scmp.ne.s32.totalorder %s50, %s52
      %p56 = scmp.eq.s32.totalorder %s16, 0
      %p57 = por %p55, %p56
      %p58 = scmp.ne.s32.totalorder %s50, %s52
      %p59 = scmp.eq.s32.totalorder %s21, 1
      %p60 = por %p58, %p59
      %p61 = scmp.ne.s32.totalorder %s52, %s53
      %p62 = scmp.eq.s32.totalorder %s21, 0
      %p63 = por %p61, %p62
      %p64 = scmp.ne.s32.totalorder %s52, %s53
      %p65 = scmp.eq.s32.totalorder %s22, 1
      %p66 = por %p64, %p65
      %p68 = scmp.ne.s32.totalorder %s53, %s67
      %p69 = scmp.eq.s32.totalorder %s22, 0
      %p70 = por %p68, %p69
      %s72 = sadd.s32 %s71, 1
      %p75 = scmp.eq.s32.totalorder %s16, 1
      %p76 = scmp.ne.s32.totalorder %s71, %s73
      %p77 = scmp.eq.s32.totalorder %s16, 0
      %p78 = por %p76, %p77
      %p79 = scmp.ne.s32.totalorder %s71, %s73
      %p80 = scmp.eq.s32.totalorder %s21, 1
      %p81 = por %p79, %p80
      %p82 = scmp.ne.s32.totalorder %s73, %s74
      %p83 = scmp.eq.s32.totalorder %s21, 0
      %p84 = por %p82, %p83
      %p85 = scmp.ne.s32.totalorder %s73, %s74
      %p86 = scmp.eq.s32.totalorder %s22, 1
      %p87 = por %p85, %p86
      %p89 = scmp.ne.s32.totalorder %s74, %s88
      %p90 = scmp.eq.s32.totalorder %s22, 0
      %p91 = por %p89, %p90
      %s92 = ssub.s32 %s16, %s23
      %p93 = scmp.eq.s32.totalorder %s92, 0
      %s95 = sadd.s32 %s94, 1
      %s96 = scalar_select %p93, %s94, %s95
      %p99 = pneg %p93
      %p100 = scmp.eq.s32.totalorder %s16, 1
      %p101 = por %p99, %p100
      %p102 = scmp.ne.s32.totalorder %s94, %s97
      %p103 = scmp.eq.s32.totalorder %s16, 0
      %p104 = por %p102, %p103
      %p105 = scmp.ne.s32.totalorder %s94, %s97
      %p106 = scmp.eq.s32.totalorder %s21, 1
      %p107 = por %p105, %p106
      %p108 = scmp.ne.s32.totalorder %s97, %s98
      %p109 = scmp.eq.s32.totalorder %s21, 0
      %p110 = por %p108, %p109
      %p111 = scmp.ne.s32.totalorder %s97, %s98
      %p112 = scmp.eq.s32.totalorder %s22, 1
      %p113 = por %p111, %p112
      %p115 = scmp.ne.s32.totalorder %s98, %s114
      %p116 = scmp.eq.s32.totalorder %s22, 0
      %p117 = por %p115, %p116
      %p118 = scmp.le.s32.totalorder 1, %s16
      %p119 = scmp.lt.s32.totalorder %s16, 3
      %p120 = pnand %p118, %p119
      %p121 = pneg %p120
      // Predicated region
      $region9: #{tpu_custom_call.1} parent=5 // pred_check
        _
      $region10: #{tpu_custom_call.1} parent=5 // pred_check_branch
        %123 = sbr.rel (%p120) target = $region12
      $region11: #{tpu_custom_call.1} parent=5 // pred_region
        %s124 = ssub.s32 %s16, 1
        // Predicated region
        $region13: #{tpu_custom_call.1} parent=11 // pred_check
          %p125 = pneg %p63
        $region14: #{tpu_custom_call.1} parent=11 // pred_check_branch
          %127 = sbr.rel (%p125) target = $region16
        $region15: #{tpu_custom_call.1} parent=11 // pred_region
          %s129 = ssub.s32 4864, 4864
          %130 = vsyncadd [#allocation6], %s129
          %s131 = sshll.u32 [#allocation5], 4
          %s132 = int_to_ptr.vmem [resolvable:$true] %s131
          %137 = dma.hbm_to_vmem [thread:$0]  %s1, 4864, %s132, [#allocation6], 128, 128, 8
        $region16: #{tpu_custom_call.1} parent=11 // pred_fallthru
          _
        // Predicated region
        $region17: #{tpu_custom_call.1} parent=11 // pred_check
          %p138 = pneg %p84
        $region18: #{tpu_custom_call.1} parent=11 // pred_check_branch
          %140 = sbr.rel (%p138) target = $region20
        $region19: #{tpu_custom_call.1} parent=11 // pred_region
          _
        $region20: #{tpu_custom_call.1} parent=11 // pred_fallthru
          _
      $region12: #{tpu_custom_call.1} parent=5 // pred_fallthru
        _
      %p141 = scmp.lt.s32.totalorder %s16, 2
      // Predicated region
      $region21: #{tpu_custom_call.1} parent=5 // pred_check
        %p142 = pneg %p141
      $region22: #{tpu_custom_call.1} parent=5 // pred_check_branch
        %144 = sbr.rel (%p142) target = $region24
      $region23: #{tpu_custom_call.1} parent=5 // pred_region
        // Predicated region
        $region25: #{tpu_custom_call.1} parent=23 // pred_check
          %p145 = pneg %p36
        $region26: #{tpu_custom_call.1} parent=23 // pred_check_branch
          %147 = sbr.rel (%p145) target = $region28
        $region27: #{tpu_custom_call.1} parent=23 // pred_region
          %s148 = sand.u32 %s26, 1
          %s149 = scalar_lea.sflag [#allocation3], %s148
          %s150 = sand.u32 %s26, 1
          %s151 = smul.addr %s150, 24
          %s152 = scalar_lea.vmem [#allocation2], %s151
          %s154 = ssub.s32 384, 384
          %155 = vsyncadd %s149, %s154
          %s156 = smul.addr %s16, 3
          %s157 = smul.addr %s156, 128
          %s158 = scalar_lea.hbm %s0, %s157
          %s160 = sshll.u32 %s152, 4
          %s161 = int_to_ptr.vmem [resolvable:$true] %s160
          %163 = dma.hbm_to_vmem [thread:$0]  %s158, 384, %s161, %s149
        $region28: #{tpu_custom_call.1} parent=23 // pred_fallthru
          _
      $region24: #{tpu_custom_call.1} parent=5 // pred_fallthru
        _
      %p164 = scmp.le.s32.totalorder 1, %s16
      %p165 = scmp.lt.s32.totalorder %s16, 3
      %p166 = pnand %p164, %p165
      %p167 = pneg %p166
      // Predicated region
      $region29: #{tpu_custom_call.1} parent=5 // pred_check
        _
      $region30: #{tpu_custom_call.1} parent=5 // pred_check_branch
        %169 = sbr.rel (%p166) target = $region32
      $region31: #{tpu_custom_call.1} parent=5 // pred_region
        %s170 = ssub.s32 %s16, 1
        %s171 = sand.u32 %s29, 1
        %s172 = scalar_lea.sflag [#allocation3], %s171
        %s173 = sand.u32 %s29, 1
        %s174 = smul.addr %s173, 24
        %s175 = scalar_lea.vmem [#allocation2], %s174
        // Predicated region
        $region33: #{tpu_custom_call.1} parent=31 // pred_check
          %p176 = pneg %p42
        $region34: #{tpu_custom_call.1} parent=31 // pred_check_branch
          %178 = sbr.rel (%p176) target = $region36
        $region35: #{tpu_custom_call.1} parent=31 // pred_region
          %179 = dma.done %s172, 384
        $region36: #{tpu_custom_call.1} parent=31 // pred_fallthru
          _
        // Predicated region
        $region37: #{tpu_custom_call.1} parent=31 // pred_check
          %p180 = pneg %p63
        $region38: #{tpu_custom_call.1} parent=31 // pred_check_branch
          %182 = sbr.rel (%p180) target = $region40
        $region39: #{tpu_custom_call.1} parent=31 // pred_region
          %183 = dma.done [#allocation6], 4864
        $region40: #{tpu_custom_call.1} parent=31 // pred_fallthru
          _
        %s184 = sand.u32 %s29, 1
        %s185 = scalar_lea.sflag [#allocation3], %s184
        %s186 = sand.u32 %s29, 1
        %s187 = smul.addr %s186, 24
        %s188 = scalar_lea.vmem [#allocation2], %s187
        %p189 = pneg %p42
        %p190 = pneg %p39
        %p191 = pneg %p63
        %p192 = pneg %p60
        %p193 = pneg %p84
        %p194 = pneg %p81
        %p195 = pneg %p110
        %p196 = pneg %p107
        %s197 = sand.u32 %s97, 1
        %s198 = scalar_lea.sflag [#allocation4], %s197
        %s199 = sand.u32 %s97, 1
        %s200 = smul.addr %s199, 8
        %s201 = scalar_lea.vmem [#allocation7], %s200
        %v202 = vld [vmem:[%s175] sm:$0xff]
        %v203 = vld [vmem:[%s175 + $0x8] sm:$0xff]
        %v204 = vld [vmem:[%s175 + $0x10] sm:$0xff]
        %v205 = vld [vmem:[#allocation5] sm:$0xff]
        %v206 = vld [vmem:[#allocation5 + $0x8] sm:$0xff]
        %v207 = vld [vmem:[#allocation5 + $0x10] sm:$0xff]
        %v208 = vld [vmem:[#allocation5 + $0x18] sm:$0xff]
        %v209 = vld [vmem:[#allocation5 + $0x20] sm:$0xff]
        %v210 = vld [vmem:[#allocation5 + $0x28] sm:$0xff]
        %v211 = vld [vmem:[#allocation5 + $0x30] sm:$0xff]
        %v212 = vld [vmem:[#allocation5 + $0x38] sm:$0xff]
        %v213 = vld [vmem:[#allocation5 + $0x40] sm:$0xff]
        %v214 = vld [vmem:[#allocation5 + $0x48] sm:$0xff]
        %v215 = vld [vmem:[#allocation5 + $0x50] sm:$0xff]
        %v216 = vld [vmem:[#allocation5 + $0x58] sm:$0xff]
        %v217 = vld [vmem:[#allocation5 + $0x60] sm:$0xff]
        %v218 = vld [vmem:[#allocation5 + $0x68] sm:$0xff]
        %v219 = vld [vmem:[#allocation5 + $0x70] sm:$0xff]
        %v220 = vld [vmem:[#allocation5 + $0x78] sm:$0xff]
        %v221 = vld [vmem:[#allocation5 + $0x80] sm:$0xff]
        %v222 = vld [vmem:[#allocation5 + $0x88] sm:$0xff]
        %v223 = vld [vmem:[#allocation5 + $0x90] sm:$0xff]
        %v224 = vld [vmem:[#allocation5 + $0x98] sm:$0xff]
        %v225 = vld [vmem:[#allocation5 + $0xa0] sm:$0xff]
        %v226 = vld [vmem:[#allocation5 + $0xa8] sm:$0xff]
        %v227 = vld [vmem:[#allocation5 + $0xb0] sm:$0xff]
        %v228 = vld [vmem:[#allocation5 + $0xb8] sm:$0xff]
        %v229 = vld [vmem:[#allocation5 + $0xc0] sm:$0xff]
        %v230 = vld [vmem:[#allocation5 + $0xc8] sm:$0xff]
        %v231 = vld [vmem:[#allocation5 + $0xd0] sm:$0xff]
        %v232 = vld [vmem:[#allocation5 + $0xd8] sm:$0xff]
        %v233 = vld [vmem:[#allocation5 + $0xe0] sm:$0xff]
        %v234 = vld [vmem:[#allocation5 + $0xe8] sm:$0xff]
        %v235 = vld [vmem:[#allocation5 + $0xf0] sm:$0xff]
        %v236 = vld [vmem:[#allocation5 + $0xf8] sm:$0xff]
        %v237 = vld [vmem:[#allocation5 + $0x100] sm:$0xff]
        %v238 = vld [vmem:[#allocation5 + $0x108] sm:$0xff]
        %v239 = vld [vmem:[#allocation5 + $0x110] sm:$0xff]
        %v240 = vld [vmem:[#allocation5 + $0x118] sm:$0xff]
        %v241 = vld [vmem:[#allocation5 + $0x120] sm:$0xff]
        %v242 = vld [vmem:[#allocation5 + $0x128] sm:$0xff]
        %v243 = vld [vmem:[%s2] sm:$0x1]
        %v245 = vlaneseq
        %v246 = vshrl.u32 %v245, 7
        %v247 = vsub.s32 0, %v246
        %v248 = vrot.slane %v243, %v247
        %vm250 = vcmask 392192
        %v252 = vsel %vm250, %v204, 0
        %254 = vmatprep.subr.mxu0 0.0
        %255 = vmatpush1.msra.mxu0 %v220
        %256 = vmatprep.subr.mxu0 0.0
        %257 = vmatpush1.msra.mxu0 %v219
        %258 = vmatprep.subr.mxu0 0.0
        %259 = vmatpush1.msra.mxu0 %v218
        %260 = vmatprep.subr.mxu0 0.0
        %261 = vmatpush1.msra.mxu0 %v217
        %262 = vmatprep.subr.mxu0 0.0
        %263 = vmatpush1.msra.mxu0 %v216
        %264 = vmatprep.subr.mxu0 0.0
        %265 = vmatpush1.msra.mxu0 %v215
        %266 = vmatprep.subr.mxu0 0.0
        %267 = vmatpush1.msra.mxu0 %v214
        %268 = vmatprep.subr.mxu0 0.0
        %269 = vmatpush1.msra.mxu0 %v213
        %270 = vmatprep.subr.mxu0 0.0
        %271 = vmatpush1.msra.mxu0 %v212
        %272 = vmatprep.subr.mxu0 0.0
        %273 = vmatpush1.msra.mxu0 %v211
        %274 = vmatprep.subr.mxu0 0.0
        %275 = vmatpush1.msra.mxu0 %v210
        %276 = vmatprep.subr.mxu0 0.0
        %277 = vmatpush1.msra.mxu0 %v209
        %278 = vmatprep.subr.mxu0 0.0
        %279 = vmatpush1.msra.mxu0 %v208
        %280 = vmatprep.subr.mxu0 0.0
        %281 = vmatpush1.msra.mxu0 %v207
        %282 = vmatprep.subr.mxu0 0.0
        %283 = vmatpush1.msra.mxu0 %v206
        %284 = vmatprep.subr.mxu0 0.0
        %285 = vmatpush1.msra.mxu0 %v205
        %286 = vmatprep.subr.mxu0 0.0
        %287 = vmatpush2.msra.mxu0 %v236
        %288 = vmatprep.subr.mxu0 0.0
        %289 = vmatpush2.msra.mxu0 %v235
        %290 = vmatprep.subr.mxu0 0.0
        %291 = vmatpush2.msra.mxu0 %v234
        %292 = vmatprep.subr.mxu0 0.0
        %293 = vmatpush2.msra.mxu0 %v233
        %294 = vmatprep.subr.mxu0 0.0
        %295 = vmatpush2.msra.mxu0 %v232
        %296 = vmatprep.subr.mxu0 0.0
        %297 = vmatpush2.msra.mxu0 %v231
        %298 = vmatprep.subr.mxu0 0.0
        %299 = vmatpush2.msra.mxu0 %v230
        %300 = vmatprep.subr.mxu0 0.0
        %301 = vmatpush2.msra.mxu0 %v229
        %302 = vmatprep.subr.mxu0 0.0
        %303 = vmatpush2.msra.mxu0 %v228
        %304 = vmatprep.subr.mxu0 0.0
        %305 = vmatpush2.msra.mxu0 %v227
        %306 = vmatprep.subr.mxu0 0.0
        %307 = vmatpush2.msra.mxu0 %v226
        %308 = vmatprep.subr.mxu0 0.0
        %309 = vmatpush2.msra.mxu0 %v225
        %310 = vmatprep.subr.mxu0 0.0
        %311 = vmatpush2.msra.mxu0 %v224
        %312 = vmatprep.subr.mxu0 0.0
        %313 = vmatpush2.msra.mxu0 %v223
        %314 = vmatprep.subr.mxu0 0.0
        %315 = vmatpush2.msra.mxu0 %v222
        %316 = vmatprep.subr.mxu0 0.0
        %317 = vmatpush2.msra.mxu0 %v221
        %318 = vmatprep.mubr.f32.mxu0 %v203
        %319 = vmatmul.mubr.f32.gmra.mxu0 %v202
        %v320 = vpop.f32.mrf.mxu0
        %v321 = vadd.f32 %v248, %v320
        %v322 = vpop.f32.mrf.mxu0
        %323 = vdwg.mxu0
        %324 = vmatprep.subr.mxu0 0.0
        %325 = vmatpush1.msra.mxu0 0.0
        %326 = vmatprep.subr.mxu0 0.0
        %327 = vmatpush1.msra.mxu0 0.0
        %328 = vmatprep.subr.mxu0 0.0
        %329 = vmatpush1.msra.mxu0 0.0
        %330 = vmatprep.subr.mxu0 0.0
        %331 = vmatpush1.msra.mxu0 0.0
        %332 = vmatprep.subr.mxu0 0.0
        %333 = vmatpush1.msra.mxu0 0.0
        %334 = vmatprep.subr.mxu0 0.0
        %335 = vmatpush1.msra.mxu0 0.0
        %336 = vmatprep.subr.mxu0 0.0
        %337 = vmatpush1.msra.mxu0 0.0
        %338 = vmatprep.subr.mxu0 0.0
        %339 = vmatpush1.msra.mxu0 0.0
        %340 = vmatprep.subr.mxu0 0.0
        %341 = vmatpush1.msra.mxu0 0.0
        %342 = vmatprep.subr.mxu0 0.0
        %343 = vmatpush1.msra.mxu0 0.0
        %344 = vmatprep.subr.mxu0 0.0
        %345 = vmatpush1.msra.mxu0 %v242
        %346 = vmatprep.subr.mxu0 0.0
        %347 = vmatpush1.msra.mxu0 %v241
        %348 = vmatprep.subr.mxu0 0.0
        %349 = vmatpush1.msra.mxu0 %v240
        %350 = vmatprep.subr.mxu0 0.0
        %351 = vmatpush1.msra.mxu0 %v239
        %352 = vmatprep.subr.mxu0 0.0
        %353 = vmatpush1.msra.mxu0 %v238
        %354 = vmatprep.subr.mxu0 0.0
        %355 = vmatpush1.msra.mxu0 %v237
        %356 = vmatprep.subr.mxu0 0.0
        %357 = vmatpush2.msra.mxu0 0.0
        %358 = vmatprep.subr.mxu0 0.0
        %359 = vmatpush2.msra.mxu0 0.0
        %360 = vmatprep.subr.mxu0 0.0
        %361 = vmatpush2.msra.mxu0 0.0
        %362 = vmatprep.subr.mxu0 0.0
        %363 = vmatpush2.msra.mxu0 0.0
        %364 = vmatprep.subr.mxu0 0.0
        %365 = vmatpush2.msra.mxu0 0.0
        %366 = vmatprep.subr.mxu0 0.0
        %367 = vmatpush2.msra.mxu0 0.0
        %368 = vmatprep.subr.mxu0 0.0
        %369 = vmatpush2.msra.mxu0 0.0
        %370 = vmatprep.subr.mxu0 0.0
        %371 = vmatpush2.msra.mxu0 0.0
        %372 = vmatprep.subr.mxu0 0.0
        %373 = vmatpush2.msra.mxu0 0.0
        %374 = vmatprep.subr.mxu0 0.0
        %375 = vmatpush2.msra.mxu0 0.0
        %376 = vmatprep.subr.mxu0 0.0
        %377 = vmatpush2.msra.mxu0 0.0
        %378 = vmatprep.subr.mxu0 0.0
        %379 = vmatpush2.msra.mxu0 0.0
        %380 = vmatprep.subr.mxu0 0.0
        %381 = vmatpush2.msra.mxu0 0.0
        %382 = vmatprep.subr.mxu0 0.0
        %383 = vmatpush2.msra.mxu0 0.0
        %384 = vmatprep.subr.mxu0 0.0
        %385 = vmatpush2.msra.mxu0 0.0
        %386 = vmatprep.subr.mxu0 0.0
        %387 = vmatpush2.msra.mxu0 0.0
        %388 = vmatprep.mubr.f32.mxu0 0.0
        %389 = vmatmul.mubr.f32.gmra.mxu0 %v252
        %v390 = vpop.f32.mrf.mxu0
        %v391 = vadd.f32 %v321, %v390
        %v392 = vpop.f32.mrf.mxu0
        %393 = vdwg.mxu0
        %394 = vst [vmem:[%s201] sm:$0xff] %v391
        %s395 = sand.u32 %s97, 1
        %s396 = scalar_lea.sflag [#allocation4], %s395
        %s397 = sand.u32 %s97, 1
        %s398 = smul.addr %s397, 8
        %s399 = scalar_lea.vmem [#allocation7], %s398
        // Predicated region
        $region41: #{tpu_custom_call.1} parent=31 // pred_check
          %p400 = pneg %p107
        $region42: #{tpu_custom_call.1} parent=31 // pred_check_branch
          %402 = sbr.rel (%p400) target = $region44
        $region43: #{tpu_custom_call.1} parent=31 // pred_region
          %s404 = ssub.s32 128, 128
          %405 = vsyncadd %s396, %s404
          %s406 = smul.addr %s21, 128
          %s407 = scalar_lea.hbm %s3, %s406
          %s409 = sshll.u32 %s399, 4
          %s410 = int_to_ptr.vmem [resolvable:$true] %s409
          %412 = dma.vmem_to_hbm [thread:$0]  %s410, 128, %s407, %s396
        $region44: #{tpu_custom_call.1} parent=31 // pred_fallthru
          _
      $region32: #{tpu_custom_call.1} parent=5 // pred_fallthru
        _
      %p413 = scmp.le.s32.totalorder 2, %s16
      // Predicated region
      $region45: #{tpu_custom_call.1} parent=5 // pred_check
        %p414 = pneg %p413
      $region46: #{tpu_custom_call.1} parent=5 // pred_check_branch
        %416 = sbr.rel (%p414) target = $region48
      $region47: #{tpu_custom_call.1} parent=5 // pred_region
        %s417 = ssub.s32 %s16, 2
        // Predicated region
        $region49: #{tpu_custom_call.1} parent=47 // pred_check
          %p418 = pneg %p113
        $region50: #{tpu_custom_call.1} parent=47 // pred_check_branch
          %420 = sbr.rel (%p418) target = $region52
        $region51: #{tpu_custom_call.1} parent=47 // pred_region
          %s421 = sand.u32 %s98, 1
          %s422 = scalar_lea.sflag [#allocation4], %s421
          %s423 = sand.u32 %s98, 1
          %s424 = smul.addr %s423, 8
          %s425 = scalar_lea.vmem [#allocation7], %s424
          %426 = dma.done %s422, 128
        $region52: #{tpu_custom_call.1} parent=47 // pred_fallthru
          _
      $region48: #{tpu_custom_call.1} parent=5 // pred_fallthru
        _
    $region6: #{tpu_custom_call.1} parent=1 // loop_footer
      %s20 = sadd.s32 1, %s16
    $region7: #{tpu_custom_call.1} parent=1 // loop_footer_branch
      %15 = sbr.rel target = $region3
    $region8: #{tpu_custom_call.1} parent=1 // loop_exit
      _
    %427 = vsyncpa [#allocation3], 1
    %s428 = scalar_lea.sflag [#allocation3], 1
    %429 = vsyncpa %s428, 1
    %430 = vsyncpa [#allocation6], 1
    %431 = vsyncpa [#allocation4], 1
    %s432 = scalar_lea.sflag [#allocation4], 1
    %433 = vsyncpa %s432, 1

</llo_original>
